<compile_context>
chip_gen: v5e
topology: v5e:2x2
jax: 0.10.0
libtpu: 0.0.40
codegen_flags: <defaults>
</compile_context>

<pallas_src>
import functools

import jax
import jax.numpy as jnp
from jax.experimental import pallas as pl
from jax.experimental.pallas import tpu as pltpu


def _round_up(x, m):
    return ((x + m - 1) // m) * m


@functools.lru_cache(maxsize=1)
def _vmem_capacity_bytes():
    # Best-effort trace-time hardware query; fall back to the smallest
    # per-TensorCore VMEM of the supported generations (v7x: 64 MiB).
    try:
        info = pltpu.get_tpu_info()
        return int(getattr(info, "vmem_capacity_bytes", 64 << 20))
    except Exception:
        return 64 << 20


# --------------------------------------------------------------------------
# Kernels
# --------------------------------------------------------------------------
def _gemm_bias_kernel_single_k(x_ref, w_ref, b_ref, o_ref):
    """Whole-K GEMM tile: o = x @ w + b (f32 accumulate, cast on store)."""
    acc = jnp.dot(x_ref[...], w_ref[...], preferred_element_type=jnp.float32)
    o_ref[...] = (acc + b_ref[...]).astype(o_ref.dtype)


def _gemm_bias_kernel_multi_k(x_ref, w_ref, b_ref, o_ref, acc_ref):
    """K-tiled GEMM tile with f32 VMEM accumulator over the last grid axis."""
    @pl.when(pl.program_id(2) == 0)
    def _init():
        acc_ref[...] = jnp.zeros_like(acc_ref)

    acc_ref[...] += jnp.dot(
        x_ref[...], w_ref[...], preferred_element_type=jnp.float32
    )

    @pl.when(pl.program_id(2) == pl.num_programs(2) - 1)
    def _finalize():
        o_ref[...] = (acc_ref[...] + b_ref[...]).astype(o_ref.dtype)


# --------------------------------------------------------------------------
# Tiled GEMM + bias wrapper
# --------------------------------------------------------------------------
def _pallas_gemm_bias(x2d, wt, bias, *, mxu_dtype=jnp.bfloat16,
                      tm_cap=None, tn_cap=None, tk_cap=None):
    """y = x2d @ wt + bias  (x2d: (N, K), wt: (K, M), bias: (M,)) -> (N, M)."""
    n, kin = x2d.shape
    kin2, mout = wt.shape
    assert kin == kin2
    out_dtype = x2d.dtype

    compute_dtype = (jnp.dtype(mxu_dtype) if mxu_dtype is not None
                     else jnp.dtype(x2d.dtype))
    esize = compute_dtype.itemsize
    out_esize = jnp.dtype(out_dtype).itemsize

    if x2d.dtype != compute_dtype:
        x2d = x2d.astype(compute_dtype)
    if wt.dtype != compute_dtype:
        wt = wt.astype(compute_dtype)

    # Generation-aware tile caps: v5e/v6e (128 MiB VMEM) take larger tiles;
    # v7x (64 MiB physical / 32 MiB scoped) keeps the conservative caps.
    big_vmem = _vmem_capacity_bytes() >= (100 << 20)
    if big_vmem:
        d_tm, d_tn, d_tk = (1024, 1024, 1024) if esize <= 2 else (512, 768, 768)
    else:
        d_tm, d_tn, d_tk = (512, 512, 1024) if esize <= 2 else (512, 512, 512)
    tm_cap = d_tm if tm_cap is None else tm_cap
    tn_cap = d_tn if tn_cap is None else tn_cap
    tk_cap = d_tk if tk_cap is None else tk_cap

    # Sublane granularity: 16 for packed bf16 rows, 8 for f32.
    sub = 16 if esize <= 2 else 8
    # Lane granularity: 256 for the v6e/v7x 256x256 MXU when the dim is large
    # enough; 128 fallback for small layers.
    grain_k = 256 if kin >= 256 else 128
    grain_n = 256 if mout >= 256 else 128

    tm = min(tm_cap, _round_up(n, sub))
    tk = min(tk_cap, _round_up(kin, grain_k))
    tn = min(tn_cap, _round_up(mout, grain_n))

    n_p = _round_up(n, tm)
    k_p = _round_up(kin, tk)
    m_p = _round_up(mout, tn)

    # Megacore: guarantee >= 2 blocks on a "parallel" axis so v7x's two
    # TensorCores both get work (near-free extra grid step on 1-TC chips).
    if (n_p // tm) == 1 and (m_p // tn) == 1 and m_p >= 2 * grain_n:
        tn = _round_up(m_p // 2, grain_n)
        m_p = _round_up(mout, tn)

    # Pad only when needed (jnp.pad / output slice each add an HBM pass).
    # K-axis guard stays strict: we only skip when k_p == kin exactly.
    if n_p != n or k_p != kin:
        x_p = jnp.pad(x2d, ((0, n_p - n), (0, k_p - kin)))
    else:
        x_p = x2d
    if k_p != kin or m_p != mout:
        w_p = jnp.pad(wt, ((0, k_p - kin), (0, m_p - mout)))
    else:
        w_p = wt
    b2d = bias.reshape(1, mout).astype(jnp.float32)
    b_p = jnp.pad(b2d, ((0, 0), (0, m_p - mout))) if m_p != mout else b2d

    n_blocks, m_blocks, k_blocks = n_p // tm, m_p // tn, k_p // tk
    multi_k = k_blocks > 1

    # Double-buffered VMEM footprint -> scoped limit (safe on every gen).
    footprint = (2 * (tm * tk + tk * tn) * esize + 2 * tn * 4
                 + 2 * tm * tn * out_esize + (tm * tn * 4 if multi_k else 0))
    vmem_limit = max(int(footprint * 1.3) + (4 << 20), 32 << 20)

    cost = pl.CostEstimate(
        flops=2 * n_p * k_p * m_p,
        transcendentals=0,
        bytes_accessed=(n_p * k_p * esize * m_blocks      # x re-read per j
                        + k_p * m_p * esize * n_blocks    # w re-read per i
                        + m_p * 4 * n_blocks              # bias
                        + n_p * m_p * out_esize),         # output write
    )

    if multi_k:
        grid_spec = pltpu.PrefetchScalarGridSpec(
            num_scalar_prefetch=0,
            grid=(n_blocks, m_blocks, k_blocks),
            in_specs=[
                pl.BlockSpec((tm, tk), lambda i, j, l: (i, l)),
                pl.BlockSpec((tk, tn), lambda i, j, l: (l, j)),
                pl.BlockSpec((1, tn), lambda i, j, l: (0, j)),
            ],
            out_specs=pl.BlockSpec((tm, tn), lambda i, j, l: (i, j)),
            scratch_shapes=[pltpu.VMEM((tm, tn), jnp.float32)],
        )
        kernel = _gemm_bias_kernel_multi_k
        dims = ("parallel", "parallel", "arbitrary")
    else:
        # Whole K strip fits one tile: collapse the reduction axis entirely.
        grid_spec = pltpu.PrefetchScalarGridSpec(
            num_scalar_prefetch=0,
            grid=(n_blocks, m_blocks),
            in_specs=[
                pl.BlockSpec((tm, k_p), lambda i, j: (i, 0)),
                pl.BlockSpec((k_p, tn), lambda i, j: (0, j)),
                pl.BlockSpec((1, tn), lambda i, j: (0, j)),
            ],
            out_specs=pl.BlockSpec((tm, tn), lambda i, j: (i, j)),
        )
        kernel = _gemm_bias_kernel_single_k
        dims = ("parallel", "parallel")

    out_p = pl.pallas_call(
        kernel,
        out_shape=jax.ShapeDtypeStruct((n_p, m_p), out_dtype),
        grid_spec=grid_spec,
        compiler_params=pltpu.CompilerParams(
            dimension_semantics=dims,
            vmem_limit_bytes=vmem_limit,
        ),
        cost_estimate=cost,
    )(x_p, w_p, b_p)

    if n_p != n or m_p != mout:
        out_p = out_p[:n, :mout]
    return out_p


# --------------------------------------------------------------------------
# Module forward
# --------------------------------------------------------------------------
def _apply_spectral_update(U, S, V, A, B, C, idx, top):
    r = A.shape[1]
    if top:
        if isinstance(idx, (list, tuple)):
            assert len(idx) == r, "index list doesn't match lora rank"
            # PyTorch `U[:, idx] += A` with duplicate indices is a scatter-add;
            # here we require unique indices so .set(...) matches exactly.
            assert len(set(idx)) == len(idx), "idx must contain unique indices"
            ii = jnp.asarray(idx)
            pad_u = U.at[:, ii].set(U[:, ii] + A)
            pad_s = S.at[ii].set(S[ii] + C)
            pad_v = V.at[:, ii].set(V[:, ii] + B)
        else:
            start = int(idx) * r
            pad_u = U.at[:, start:start + r].add(A)
            pad_s = S.at[start:start + r].add(C)
            pad_v = V.at[:, start:start + r].add(B)
    else:
        pad_u = U.at[:, U.shape[1] - r:].add(A)
        pad_s = S.at[S.shape[0] - r:].add(C)
        pad_v = V.at[:, V.shape[1] - r:].add(B)
    return pad_u, pad_s, pad_v


def spectral_linear_forward(x, U, S, V, A, B, C, bias, *, idx=0, top=True,
                            mxu_dtype=jnp.bfloat16, use_factored=None,
                            tm_cap=None, tn_cap=None, tk_cap=None):
    """Spectral update + F.linear forward via Pallas GEMM(s)."""
    pad_u, pad_s, pad_v = _apply_spectral_update(U, S, V, A, B, C, idx, top)

    out_features = pad_u.shape[0]
    in_features = pad_v.shape[0]
    if bias is None:
        bias = jnp.zeros((out_features,), dtype=jnp.float32)

    lead = x.shape[:-1]
    x2d = x.reshape(-1, x.shape[-1])
    n = x2d.shape[0]
    caps = dict(tm_cap=tm_cap, tn_cap=tn_cap, tk_cap=tk_cap)

    if use_factored is None:
        # For decode-sized batches the pad_W reconstruction (in*out*k FLOPs
        # plus an HBM write+read of wt) dwarfs the x@wt GEMM; use the
        # factored path below the break-even point N ~ min(in, out).
        use_factored = n <= min(in_features, out_features)

    if use_factored:
        # y = (x @ pad_V) @ (diag(pad_S) @ pad_U.T) + b   (two thin GEMMs;
        # the diag(S) fold is a parameter-only elementwise op).
        k = pad_s.shape[0]
        zeros_k = jnp.zeros((k,), dtype=jnp.float32)
        t = _pallas_gemm_bias(x2d, pad_v, zeros_k, mxu_dtype=mxu_dtype, **caps)
        w2 = (pad_u * pad_s[None, :]).T                   # (k, out)
        out2d = _pallas_gemm_bias(t, w2, bias, mxu_dtype=mxu_dtype, **caps)
    else:
        # Hoisted, parameter-only reconstruction (once per call, not per tile):
        #   wt = pad_W.T = (pad_V * pad_S) @ pad_U.T      (in, out)
        wt = jnp.dot(pad_v * pad_s[None, :], pad_u.T,
                     preferred_element_type=jnp.float32)
        out2d = _pallas_gemm_bias(x2d, wt, bias, mxu_dtype=mxu_dtype, **caps)

    return out2d.reshape(*lead, out2d.shape[-1]), (pad_u, pad_s, pad_v)


# --------------------------------------------------------------------------
# Demo / correctness checks
# --------------------------------------------------------------------------
if __name__ == "__main__":
    # Linear(32 -> 32), rank=4, top=True, idx=0.
    in_features, out_features, rank, idx = 32, 32, 4, 0
    batch, seq = 2, 8

    key = jax.random.PRNGKey(0)
    k_w, k_b, k_a, k_bb, k_c, k_x = jax.random.split(key, 6)

    # Original module weight + bias and its SVD (torch.svd convention:
    # W = U @ diag(S) @ V.T with U (out, k), S (k,), V (in, k)).
    W = jax.random.normal(k_w, (out_features, in_features), dtype=jnp.float32)
    bias = jax.random.normal(k_b, (out_features,), dtype=jnp.float32)
    U_, S_, Vh_ = jnp.linalg.svd(W, full_matrices=False)
    V_ = Vh_.T

    # spectral_A/B/C are zeros at init; small non-zero values exercise the path.
    A = 0.01 * jax.random.normal(k_a, (U_.shape[0], rank), dtype=jnp.float32)
    B = 0.01 * jax.random.normal(k_bb, (V_.shape[0], rank), dtype=jnp.float32)
    C = 0.01 * jax.random.normal(k_c, (rank,), dtype=jnp.float32)

    x = jax.random.normal(k_x, (batch, seq, in_features), dtype=jnp.float32)

    # ---- Test 1: default (bf16 MXU + factored small-batch path) ----
    out, (pad_u, pad_s, pad_v) = spectral_linear_forward(
        x, U_, S_, V_, A, B, C, bias, idx=idx, top=True)
    out = jax.block_until_ready(out)

    pad_w = (pad_u * pad_s[None, :]) @ pad_v.T
    ref = x @ pad_w.T + bias
    assert out.shape == (batch, seq, out_features)
    err = jnp.max(jnp.abs(out - ref))
    tol = 5e-2 * jnp.max(jnp.abs(ref)) + 1e-2          # bf16 MXU tolerance
    assert err <= tol, f"bf16 factored path mismatch: {err} > {tol}"

    # ---- Test 2: forced pad_W-reconstruction path, f32 MXU (tight check) ----
    out_f32, _ = spectral_linear_forward(
        x, U_, S_, V_, A, B, C, bias, idx=idx, top=True,
        mxu_dtype=jnp.float32, use_factored=False)
    out_f32 = jax.block_until_ready(out_f32)
    assert jnp.allclose(out_f32, ref, rtol=2e-3, atol=2e-3), \
        "f32 reconstruction path mismatch"

    # ---- Test 3: multi-K accumulation kernel (force tk split) ----
    in2, out2 = 256, 128
    k2w, k2x = jax.random.split(jax.random.PRNGKey(1), 2)
    W2 = jax.random.normal(k2w, (out2, in2), dtype=jnp.float32)
    b2 = jnp.zeros((out2,), dtype=jnp.float32)
    U2, S2, Vh2 = jnp.linalg.svd(W2, full_matrices=False)
    V2 = Vh2.T
    A2 = 0.01 * jnp.ones((U2.shape[0], rank), dtype=jnp.float32)
    B2 = 0.01 * jnp.ones((V2.shape[0], rank), dtype=jnp.float32)
    C2 = 0.01 * jnp.ones((rank,), dtype=jnp.float32)
    x2 = jax.random.normal(k2x, (batch, seq, in2), dtype=jnp.float32)

    out2_arr, (pu2, ps2, pv2) = spectral_linear_forward(
        x2, U2, S2, V2, A2, B2, C2, b2, idx=0, top=True,
        mxu_dtype=jnp.float32, use_factored=False, tk_cap=128)
    out2_arr = jax.block_until_ready(out2_arr)
    ref2 = x2 @ ((pu2 * ps2[None, :]) @ pv2.T).T + b2
    assert jnp.allclose(out2_arr, ref2, rtol=2e-3, atol=2e-3), \
        "multi-K reduction path mismatch"

    print("KERNEL_OK")
</pallas_src>

<mosaic_0001>
module attributes {stable_mosaic.version = 11 : i64} {
  func.func @_gemm_bias_kernel_single_k(%arg0: i32, %arg1: i32, %arg2: memref<16x128xbf16, #tpu.memory_space<vmem>>, %arg3: memref<128x128xbf16, #tpu.memory_space<vmem>>, %arg4: memref<1x128xf32, #tpu.memory_space<vmem>>, %arg5: memref<16x128xf32, #tpu.memory_space<vmem>>) attributes {dimension_semantics = [#tpu.dimension_semantics<parallel>, #tpu.dimension_semantics<parallel>], iteration_bounds = array<i64: 1, 1>, scalar_prefetch = 0 : i64, scratch_operands = 0 : i64, tpu.core_type = #tpu.core_type<tc>, window_params = [{transform_indices = @transform_0, window_bounds = array<i64: 16, 128>}, {transform_indices = @transform_1, window_bounds = array<i64: 128, 128>}, {transform_indices = @transform_2, window_bounds = array<i64: 1, 128>}, {transform_indices = @transform_3, window_bounds = array<i64: 16, 128>}]} {
    %c0 = arith.constant 0 : index
    %c0_0 = arith.constant 0 : index
    %0 = vector.load %arg2[%c0, %c0_0] : memref<16x128xbf16, #tpu.memory_space<vmem>>, vector<16x128xbf16>
    %c0_1 = arith.constant 0 : index
    %c0_2 = arith.constant 0 : index
    %1 = vector.load %arg3[%c0_1, %c0_2] : memref<128x128xbf16, #tpu.memory_space<vmem>>, vector<128x128xbf16>
    %cst = arith.constant dense<0.000000e+00> : vector<16x128xf32>
    %2 = tpu.matmul %0, %1, %cst {dimension_numbers = #tpu.dot_dimension_numbers<[1], [0], [0], [1], [0, 0, 1, 1], [], []>} : vector<16x128xbf16>, vector<128x128xbf16>, vector<16x128xf32> -> vector<16x128xf32>
    %c0_3 = arith.constant 0 : index
    %c0_4 = arith.constant 0 : index
    %3 = vector.load %arg4[%c0_3, %c0_4] : memref<1x128xf32, #tpu.memory_space<vmem>>, vector<1x128xf32>
    %4 = vector.broadcast %3 : vector<1x128xf32> to vector<16x128xf32>
    %5 = arith.addf %2, %4 : vector<16x128xf32>
    %c0_5 = arith.constant 0 : index
    %c0_6 = arith.constant 0 : index
    %6 = vector.load %arg5[%c0_5, %c0_6] : memref<16x128xf32, #tpu.memory_space<vmem>>, vector<16x128xf32>
    tpu.vector_store %arg5[%c0_5, %c0_6], %5 {strides = array<i32>} : memref<16x128xf32, #tpu.memory_space<vmem>>, vector<16x128xf32>,
    return
  }
  func.func @transform_0(%arg0: i32, %arg1: i32) -> (i32, i32) {
    %c0_i32 = arith.constant 0 : i32
    %c0_i32_0 = arith.constant 0 : i32
    return %arg0, %c0_i32 : i32, i32
  }
  func.func @transform_1(%arg0: i32, %arg1: i32) -> (i32, i32) {
    %c0_i32 = arith.constant 0 : i32
    %c0_i32_0 = arith.constant 0 : i32
    return %c0_i32, %arg1 : i32, i32
  }
  func.func @transform_2(%arg0: i32, %arg1: i32) -> (i32, i32) {
    %c0_i32 = arith.constant 0 : i32
    %c0_i32_0 = arith.constant 0 : i32
    return %c0_i32, %arg1 : i32, i32
  }
  func.func @transform_3(%arg0: i32, %arg1: i32) -> (i32, i32) {
    %c0_i32 = arith.constant 0 : i32
    return %arg0, %arg1 : i32, i32
  }
}

</mosaic_0001>

<llo_original>
// kernel: tpu_custom_call.1
$region0: #{tpu_custom_call.1}
  #allocation0 [shape = 'u32[]', space=smem, size = 0x4, offset = 0x4, fixed_abs, tag = 'smem constant byte address 0x4 - core index']
  #allocation1 [shape = 'u32[72,128]{1,0:T(1,128)}', space=vmem, size = 0x9000, scoped, tag = 'internal scratch']
  %s0 = inlined_call_operand.hbm [shape: bf16[16,128], index: 0, kind: input, shape index: {}]
  %s1 = inlined_call_operand.hbm [shape: bf16[128,128], index: 1, kind: input, shape index: {}]
  %s2 = inlined_call_operand.vmem [shape: f32[1,128], index: 2, kind: input, shape index: {}]
  %s3 = inlined_call_operand.hbm [shape: f32[16,128], index: 3, kind: output, shape index: {}]
  %s4 = sld [smem:[#allocation0]]
  $region30: #{tpu_custom_call.1} parent=0
    _
  %s6 = ssub.s32 1, %s4
  %s7 = scalar_select 0, %s6, %s4
  $region1: #{tpu_custom_call.1} parent=0
    #allocation2 [shape = 'u8[4096]{0}', space=vmem, size = 0x1000, scoped, tag = 'input window, operand 0, single buffered']
    #allocation3 [shape = 's32[1]{0}', space=sflag, size = 0x4, scoped, tag = 'scoped memory for tpu_custom_call.1']
    #allocation4 [shape = 's32[1]{0}', space=sflag, size = 0x4, scoped, tag = 'scoped memory for tpu_custom_call.1']
    #allocation5 [shape = 'u8[32768]{0}', space=vmem, size = 0x8000, scoped, tag = 'input window, operand 1, single buffered']
    #allocation6 [shape = 's32[1]{0}', space=sflag, size = 0x4, scoped, tag = 'scoped memory for tpu_custom_call.1']
    #allocation7 [shape = 'u8[8192]{0}', space=vmem, size = 0x2000, scoped, tag = 'output window, operand 0, single buffered']
    %8 = vsyncpa [#allocation3], 0
    %9 = vsyncpa [#allocation6], 0
    %10 = vsyncpa [#allocation4], 0
    // Predicated region
    $region2: #{tpu_custom_call.1} parent=1 // pred_check
      _
    $region3: #{tpu_custom_call.1} parent=1 // pred_check_branch
      %12 = sbr.rel (0) target = $region5
    $region4: #{tpu_custom_call.1} parent=1 // pred_region
      %14 = vsyncadd [#allocation3], 0
      %s15 = sshll.u32 %s0, 4
      %s16 = int_to_ptr.hbm [resolvable:$true] %s15
      %s17 = sshll.u32 [#allocation2], 4
      %s18 = int_to_ptr.vmem [resolvable:$true] %s17
      %23 = dma.hbm_to_vmem [thread:$0]  %s16, 128, %s18, [#allocation3], 64, 64, 4
    $region5: #{tpu_custom_call.1} parent=1 // pred_fallthru
      _
    // Predicated region
    $region6: #{tpu_custom_call.1} parent=1 // pred_check
      _
    $region7: #{tpu_custom_call.1} parent=1 // pred_check_branch
      %25 = sbr.rel (0) target = $region9
    $region8: #{tpu_custom_call.1} parent=1 // pred_region
      %27 = vsyncadd [#allocation6], 0
      %s28 = sshll.u32 %s1, 4
      %s29 = int_to_ptr.hbm [resolvable:$true] %s28
      %s30 = sshll.u32 [#allocation5], 4
      %s31 = int_to_ptr.vmem [resolvable:$true] %s30
      %36 = dma.hbm_to_vmem [thread:$0]  %s29, 1024, %s31, [#allocation6], 64, 64, 4
    $region9: #{tpu_custom_call.1} parent=1 // pred_fallthru
      _
    // Predicated region
    $region10: #{tpu_custom_call.1} parent=1 // pred_check
      _
    $region11: #{tpu_custom_call.1} parent=1 // pred_check_branch
      %38 = sbr.rel (0) target = $region13
    $region12: #{tpu_custom_call.1} parent=1 // pred_region
      _
    $region13: #{tpu_custom_call.1} parent=1 // pred_fallthru
      _
    // Predicated region
    $region14: #{tpu_custom_call.1} parent=1 // pred_check
      _
    $region15: #{tpu_custom_call.1} parent=1 // pred_check_branch
      %40 = sbr.rel (0) target = $region17
    $region16: #{tpu_custom_call.1} parent=1 // pred_region
      %42 = dma.done [#allocation3], 128
    $region17: #{tpu_custom_call.1} parent=1 // pred_fallthru
      _
    // Predicated region
    $region18: #{tpu_custom_call.1} parent=1 // pred_check
      _
    $region19: #{tpu_custom_call.1} parent=1 // pred_check_branch
      %44 = sbr.rel (0) target = $region21
    $region20: #{tpu_custom_call.1} parent=1 // pred_region
      %46 = dma.done [#allocation6], 1024
    $region21: #{tpu_custom_call.1} parent=1 // pred_fallthru
      _
    %v47 = vld [vmem:[#allocation2] sm:$0xf]
    %v48 = vld [vmem:[#allocation2 + $0x4] sm:$0xf]
    %v49 = vld [vmem:[#allocation5] sm:$0xf]
    %v50 = vld [vmem:[#allocation5 + $0x4] sm:$0xf]
    %v51 = vld [vmem:[#allocation5 + $0x8] sm:$0xf]
    %v52 = vld [vmem:[#allocation5 + $0xc] sm:$0xf]
    %v53 = vld [vmem:[#allocation5 + $0x10] sm:$0xf]
    %v54 = vld [vmem:[#allocation5 + $0x14] sm:$0xf]
    %v55 = vld [vmem:[#allocation5 + $0x18] sm:$0xf]
    %v56 = vld [vmem:[#allocation5 + $0x1c] sm:$0xf]
    %v57 = vld [vmem:[#allocation5 + $0x20] sm:$0xf]
    %v58 = vld [vmem:[#allocation5 + $0x24] sm:$0xf]
    %v59 = vld [vmem:[#allocation5 + $0x28] sm:$0xf]
    %v60 = vld [vmem:[#allocation5 + $0x2c] sm:$0xf]
    %v61 = vld [vmem:[#allocation5 + $0x30] sm:$0xf]
    %v62 = vld [vmem:[#allocation5 + $0x34] sm:$0xf]
    %v63 = vld [vmem:[#allocation5 + $0x38] sm:$0xf]
    %v64 = vld [vmem:[#allocation5 + $0x3c] sm:$0xf]
    %v65 = vld [vmem:[%s2] sm:$0x1]
    %v67 = vperm.slane %v65, 0
    %v71 = vunpack.c.l.b16 %v47
    %v72 = vunpack.c.l.b16 %v48
    %v73 = vpack.c.b16 %v72, %v71
    %v91 = vunpack.c.l.b16 %v49
    %v92 = vunpack.c.l.b16 %v50
    %v93 = vunpack.c.l.b16 %v51
    %v94 = vunpack.c.l.b16 %v52
    %v95 = vunpack.c.l.b16 %v53
    %v96 = vunpack.c.l.b16 %v54
    %v97 = vunpack.c.l.b16 %v55
    %v98 = vunpack.c.l.b16 %v56
    %v99 = vunpack.c.l.b16 %v57
    %v100 = vunpack.c.l.b16 %v58
    %v101 = vunpack.c.l.b16 %v59
    %v102 = vunpack.c.l.b16 %v60
    %v103 = vunpack.c.l.b16 %v61
    %v104 = vunpack.c.l.b16 %v62
    %v105 = vunpack.c.l.b16 %v63
    %v106 = vunpack.c.l.b16 %v64
    %v107 = vpack.c.b16 %v92, %v91
    %v108 = vpack.c.b16 %v94, %v93
    %v109 = vpack.c.b16 %v96, %v95
    %v110 = vpack.c.b16 %v98, %v97
    %v111 = vpack.c.b16 %v100, %v99
    %v112 = vpack.c.b16 %v102, %v101
    %v113 = vpack.c.b16 %v104, %v103
    %v114 = vpack.c.b16 %v106, %v105
    %123 = vmatpush.bf16.msra.mxu0 %v114
    %124 = vmatpush.bf16.msra.mxu0 %v113
    %125 = vmatpush.bf16.msra.mxu0 %v112
    %126 = vmatpush.bf16.msra.mxu0 %v111
    %127 = vmatpush.bf16.msra.mxu0 %v110
    %128 = vmatpush.bf16.msra.mxu0 %v109
    %129 = vmatpush.bf16.msra.mxu0 %v108
    %130 = vmatpush.bf16.msra.mxu0 %v107
    %131 = vmatmul.bf16.gmra.mxu0 %v73
    %v132 = vpop.f32.mrf.mxu0
    %v133 = vadd.f32 %v67, %v132
    %v134 = vpop.f32.mrf.mxu0
    %v135 = vadd.f32 %v67, %v134
    %136 = vdwg.mxu0
    %137 = vst [vmem:[#allocation7] sm:$0xff] %v133
    %138 = vst [vmem:[#allocation7 + $0x8] sm:$0xff] %v135
    // Predicated region
    $region22: #{tpu_custom_call.1} parent=1 // pred_check
      _
    $region23: #{tpu_custom_call.1} parent=1 // pred_check_branch
      %140 = sbr.rel (0) target = $region25
    $region24: #{tpu_custom_call.1} parent=1 // pred_region
      %142 = vsyncadd [#allocation4], 0
      %s143 = sshll.u32 [#allocation7], 4
      %s144 = int_to_ptr.vmem [resolvable:$true] %s143
      %s145 = sshll.u32 %s3, 4
      %s146 = int_to_ptr.hbm [resolvable:$true] %s145
      %151 = dma.vmem_to_hbm [thread:$0]  %s144, 256, %s146, [#allocation4], 128, 128, 8
    $region25: #{tpu_custom_call.1} parent=1 // pred_fallthru
      _
    // Predicated region
    $region26: #{tpu_custom_call.1} parent=1 // pred_check
      _
    $region27: #{tpu_custom_call.1} parent=1 // pred_check_branch
      %153 = sbr.rel (0) target = $region29
    $region28: #{tpu_custom_call.1} parent=1 // pred_region
      %155 = dma.done [#allocation4], 256
    $region29: #{tpu_custom_call.1} parent=1 // pred_fallthru
      _
    %156 = vsyncpa [#allocation3], 1
    %157 = vsyncpa [#allocation6], 1
    %158 = vsyncpa [#allocation4], 1

</llo_original>
